<compile_context>
chip_gen: v7x
topology: tpu7x:2x2x1
jax: 0.10.0
libtpu: 0.0.40
codegen_flags: <defaults>
</compile_context>

<pallas_src>
import functools

import numpy as np
import jax
import jax.numpy as jnp
from jax import lax
from jax.experimental import pallas as pl
from jax.experimental.pallas import tpu as pltpu

BN_EPS = 1e-5


# ----------------------------------------------------------------------------
# Fused kernel: conv1(1x1)+BN+ReLU -> DW kxk+BN+ReLU -> conv3(1x1)+BN(+res)
# ----------------------------------------------------------------------------
def _mbblock_kernel(x_ref, w1_ref, b1_ref, w2_ref, b2_ref, w3_ref, b3_ref,
                    o_ref, xp_ref, h1_ref, *,
                    H, W, k, dil, stride, pad, tile_rows, hs,
                    Wo, Wc, mid, cin, cout, residual):
    """One (batch, output-row-tile) grid step of the whole MBBlock.

    x_ref  : (1, H, W*cin)       full image, (W, cin) flattened on the lane axis
    w1_ref : (W*cin, W*mid)      conv1 (BN folded) as a block-diagonal matmul
    w2_ref : (k*k, Wc*mid)       depthwise taps, pre-tiled across columns (f32)
    w3_ref : (Wc*mid, Wo*cout)   conv3 (BN folded) + column-stride selection
    o_ref  : (1, tile_rows, Wo*cout)   lane-dense output row tile
    xp_ref : (H+2*pad, W*cin)    VMEM scratch: vertically padded input copy
    h1_ref : (hs, Wp*mid)        VMEM scratch: padded h1 slab for this tile
    """
    t = pl.program_id(1)
    Hp = H + 2 * pad
    Wp = W + 2 * pad

    # --- stage the input into a vertically padded scratch so every later row
    #     read uses an 8-aligned dynamic offset.  Redone per tile so the
    #     row-tile grid axis carries no state (both axes "parallel").
    # TODO(synk): for production image sizes, row-tile the x input (haloed DMA)
    #             instead of holding / copying the full image per tile.
    if pad > 0:
        zrow = jnp.zeros((pad, W * cin), xp_ref.dtype)
        xp_ref[0:pad, :] = zrow
        xp_ref[pad + H:Hp, :] = zrow
    xp_ref[pad:pad + H, :] = x_ref[0].astype(xp_ref.dtype)

    # --- conv1 (1x1) + BN + ReLU over exactly the hs padded rows of this tile
    row0p = t * (tile_rows * stride)        # first padded h1 row of the tile
    if (tile_rows * stride) % 8 == 0:       # aligned dynamic window
        xs = xp_ref[pl.ds(pl.multiple_of(row0p, 8), hs), :]
    else:                                   # only possible when n_tiles == 1
        xs = xp_ref[0:hs, :]
    h1 = jnp.dot(xs, w1_ref[...], preferred_element_type=jnp.float32)
    h1 = jnp.maximum(h1 + b1_ref[...], 0.0)
    if pad > 0:
        # rows that are conv2's vertical zero-padding: conv1 bias must not leak
        rid = row0p + lax.broadcasted_iota(jnp.int32, (hs, 1), 0)
        h1 = jnp.where((rid >= pad) & (rid < pad + H), h1, 0.0)

    # --- write the h1 slab (zero pad columns, then the computed interior)
    if pad > 0:
        zcol = jnp.zeros((hs, pad * mid), h1_ref.dtype)
        h1_ref[:, 0:pad * mid] = zcol
        h1_ref[:, (pad + W) * mid:Wp * mid] = zcol
    h1_ref[:, pad * mid:(pad + W) * mid] = h1.astype(h1_ref.dtype)

    # --- conv2: depthwise kxk + BN + ReLU  (k row loads, k*k lane-dense FMAs)
    w2 = w2_ref[...]                                   # hoisted tap table
    acc = jnp.zeros((tile_rows, Wc * mid), jnp.float32)
    for ki in range(k):
        if stride == 1:
            rk = h1_ref[ki * dil:ki * dil + tile_rows, :]
        else:
            # TODO(synk): stride>1 strided sublane read is untested here; if it
            #             lowers poorly (esp. v5e) deinterleave rows at the store.
            rk = h1_ref[pl.ds(ki * dil, tile_rows, stride), :]
        rk = rk.astype(jnp.float32)
        for kj in range(k):
            acc = acc + rk[:, kj * dil * mid:(kj * dil + Wc) * mid] * w2[ki * k + kj]
    acc = jnp.maximum(acc + b2_ref[...], 0.0)

    # --- conv3 (1x1; column stride folded into w3_ref) + BN (+ residual)
    y = jnp.dot(acc.astype(w3_ref.dtype), w3_ref[...],
                preferred_element_type=jnp.float32)
    y = y + b3_ref[...]
    if residual:       # stride == 1 and cin == cout -> identical flat layout
        if tile_rows % 8 == 0:
            xres = x_ref[0, pl.ds(pl.multiple_of(t * tile_rows, 8), tile_rows), :]
        else:
            xres = x_ref[0, 0:tile_rows, :]
        y = y + xres.astype(jnp.float32)
    o_ref[0] = y.astype(o_ref.dtype)                   # lane-dense store


# ----------------------------------------------------------------------------
# Wrapper helpers
# ----------------------------------------------------------------------------
def _vmem_limit_bytes():
    """Per-generation VMEM request with headroom (v7x: 64 MiB, v5e/v6e: 128)."""
    cap = 64 << 20                       # conservative fallback
    try:
        info = pltpu.get_tpu_info()
        cap = int(getattr(info, "vmem_capacity_bytes", cap))
    except Exception:
        pass
    return max(16 << 20, int(cap * 0.8))


def _pick_tile_rows(Ho, H, W, cin, Wo, Wc, mid, cout, k, dil, stride, pad,
                    slab_bytes, mm_bytes, vmem_limit):
    """Largest valid row tile whose real VMEM footprint fits the budget."""
    Hp, Wp = H + 2 * pad, W + 2 * pad
    fixed = 2 * H * W * cin * 4                              # x block (dbl-buffered)
    fixed += Hp * W * cin * mm_bytes                         # padded-x scratch
    fixed += 2 * (W * cin * W * mid + Wc * mid * Wo * cout) * mm_bytes
    fixed += 2 * k * k * Wc * mid * 4
    cands = [c for c in range(1, Ho + 1)
             if Ho % c == 0 and (c % 8 == 0 or c == Ho)]     # sublane-aligned tiles

    def cost(c):
        hs = (c - 1) * stride + dil * (k - 1) + 1
        slab = hs * Wp * mid * slab_bytes
        outb = 2 * c * Wo * cout * 4
        work = (hs * W * (cin + mid) + 3 * c * Wc * mid) * 4
        return slab + outb + work

    budget = int(0.6 * vmem_limit) - fixed
    fit = [c for c in cands if cost(c) <= budget]
    return max(fit) if fit else min(cands)


def _block_diag(w, reps):
    """(a, b) -> (reps*a, reps*b) block-diagonal with `reps` copies of w."""
    a, b = w.shape
    eye = jnp.eye(reps, dtype=w.dtype)
    return (eye[:, None, :, None] * w[None, :, None, :]).reshape(reps * a, reps * b)


# ----------------------------------------------------------------------------
# Forward wrappers
# ----------------------------------------------------------------------------
def mbblock_forward_nhwc(x, params, cfg, *, tile_rows=None,
                         matmul_dtype=jnp.bfloat16, slab_dtype=None):
    """MBBlock forward, NHWC in / NHWC out (no layout transposes)."""
    N, H, W, cin = x.shape
    mid, cout = cfg["mid"], cfg["out_channels"]
    k, stride, dil = cfg["k"], cfg["stride"], cfg["dilation"]
    assert cfg.get("groups", 1) == 1  # TODO(synk): grouped 1x1 convs not implemented
    pad = (k - 1) * dil // 2
    Ho = (H + 2 * pad - dil * (k - 1) - 1) // stride + 1
    Wo = (W + 2 * pad - dil * (k - 1) - 1) // stride + 1
    Wc = (Wo - 1) * stride + 1            # stride-1 column extent of the dw stage
    residual = (cfg["in_channels"] == cout) and (stride == 1)
    slab_dtype = matmul_dtype if slab_dtype is None else slab_dtype

    # Fold eval-mode BN into the conv weights, then fold the 1x1 convs into
    # lane-dense block-diagonal matmuls over whole image rows.
    # (At 4-8 channels this is what keeps the MXU K/N dims >= 64; for very
    #  large W, tile W as well so w1b/w3s stay small.)
    w1 = (params["w1"] * params["s1"][None, :]).astype(matmul_dtype)   # (cin, mid)
    w3 = (params["w3"] * params["s3"][None, :]).astype(matmul_dtype)   # (mid, cout)
    w2 = (params["w2"] * params["s2"][None, :]).astype(jnp.float32)    # (k*k, mid)
    w1b = _block_diag(w1, W)                                           # (W*cin, W*mid)
    sel = (jnp.arange(Wc)[:, None] == stride * jnp.arange(Wo)[None, :])
    w3s = (sel.astype(w3.dtype)[:, None, :, None]
           * w3[None, :, None, :]).reshape(Wc * mid, Wo * cout)        # (Wc*mid, Wo*cout)
    w2f = jnp.tile(w2, (1, Wc))                                        # (k*k, Wc*mid)
    b1f = jnp.tile(params["b1"].reshape(1, mid), (1, W)).astype(jnp.float32)
    b2f = jnp.tile(params["b2"].reshape(1, mid), (1, Wc)).astype(jnp.float32)
    b3f = jnp.tile(params["b3"].reshape(1, cout), (1, Wo)).astype(jnp.float32)

    vmem_limit = _vmem_limit_bytes()
    slab_bytes = jnp.dtype(slab_dtype).itemsize
    mm_bytes = jnp.dtype(matmul_dtype).itemsize
    if tile_rows is None:
        tile_rows = _pick_tile_rows(Ho, H, W, cin, Wo, Wc, mid, cout, k, dil,
                                    stride, pad, slab_bytes, mm_bytes, vmem_limit)
    assert Ho % tile_rows == 0 and (tile_rows % 8 == 0 or tile_rows == Ho), (
        "tile_rows must divide Ho and be a multiple of 8 (or equal Ho)")
    n_tiles = Ho // tile_rows
    hs = (tile_rows - 1) * stride + dil * (k - 1) + 1    # h1 rows needed per tile
    Hp, Wp = H + 2 * pad, W + 2 * pad

    x_flat = x.reshape(N, H, W * cin)      # free: contiguous last-dim merge

    kern = functools.partial(
        _mbblock_kernel, H=H, W=W, k=k, dil=dil, stride=stride, pad=pad,
        tile_rows=tile_rows, hs=hs, Wo=Wo, Wc=Wc, mid=mid, cin=cin, cout=cout,
        residual=residual)

    out = pl.pallas_call(
        kern,
        out_shape=jax.ShapeDtypeStruct((N, Ho, Wo * cout), jnp.float32),
        grid_spec=pltpu.PrefetchScalarGridSpec(
            num_scalar_prefetch=0,
            grid=(N, n_tiles),
            in_specs=[
                # Full image per batch element; reused across all row tiles.
                pl.BlockSpec((1, H, W * cin), lambda n, t: (n, 0, 0)),
                pl.BlockSpec((W * cin, W * mid), lambda n, t: (0, 0)),
                pl.BlockSpec((1, W * mid), lambda n, t: (0, 0)),
                pl.BlockSpec((k * k, Wc * mid), lambda n, t: (0, 0)),
                pl.BlockSpec((1, Wc * mid), lambda n, t: (0, 0)),
                pl.BlockSpec((Wc * mid, Wo * cout), lambda n, t: (0, 0)),
                pl.BlockSpec((1, Wo * cout), lambda n, t: (0, 0)),
            ],
            out_specs=pl.BlockSpec((1, tile_rows, Wo * cout),
                                   lambda n, t: (n, t, 0)),
            scratch_shapes=[pltpu.VMEM((Hp, W * cin), matmul_dtype),
                            pltpu.VMEM((hs, Wp * mid), slab_dtype)],
        ),
        compiler_params=pltpu.CompilerParams(
            dimension_semantics=("parallel", "parallel"),
            vmem_limit_bytes=vmem_limit),
    )(x_flat, w1b, b1f, w2f, b2f, w3s, b3f)
    return out.reshape(N, Ho, Wo, cout)    # free: contiguous last-dim split


def mbblock_forward(x_nchw, params, cfg, **kw):
    """PyTorch-layout entry: (N, Cin, H, W) -> (N, Cout, Ho, Wo).

    TODO(synk): prefer mbblock_forward_nhwc inside an NHWC graph; these two
    transposes are full HBM round trips around a memory-bound block.
    """
    x = jnp.transpose(x_nchw, (0, 2, 3, 1))
    out = mbblock_forward_nhwc(x, params, cfg, **kw)
    return jnp.transpose(out, (0, 3, 1, 2))


# ----------------------------------------------------------------------------
# Deterministic parameter init (matches the module's shapes / init)
# ----------------------------------------------------------------------------
def init_params(key, in_channels, out_channels, expansion, kernel_size,
                groups=1):
    assert groups == 1  # TODO(synk): grouped 1x1 convs (groups > 1) not implemented
    mid = in_channels * expansion
    k1, k2, k3 = jax.random.split(key, 3)

    # conv1 weight: torch [mid, in, 1, 1], std = 1/in  -> matmul weight [in, mid]
    w1 = (jax.random.normal(k1, (mid, in_channels), jnp.float32)
          * (1.0 / in_channels)).T
    # conv2 depthwise weight: torch [mid, 1, k, k], std = 1 -> [k*k, mid]
    w2_raw = jax.random.normal(k2, (mid, kernel_size, kernel_size), jnp.float32)
    w2 = jnp.transpose(w2_raw, (1, 2, 0)).reshape(kernel_size * kernel_size, mid)
    # conv3 weight: torch [out, mid, 1, 1], std = 1/mid -> [mid, out]
    w3 = (jax.random.normal(k3, (out_channels, mid), jnp.float32)
          * (1.0 / mid)).T

    def bn(c):  # eval-mode BN folded to per-channel scale / bias
        gamma = jnp.ones((c,), jnp.float32)
        beta = jnp.full((c,), 1e-4, jnp.float32)
        mean = jnp.zeros((c,), jnp.float32)
        var = jnp.ones((c,), jnp.float32)
        scale = gamma / jnp.sqrt(var + BN_EPS)
        return scale, beta - mean * scale

    s1, b1 = bn(mid)
    s2, b2 = bn(mid)
    s3, b3 = bn(out_channels)
    return dict(w1=w1, w2=w2, w3=w3, s1=s1, b1=b1, s2=s2, b2=b2, s3=s3, b3=b3)


# ----------------------------------------------------------------------------
# Pure-JAX reference (for correctness check)
# ----------------------------------------------------------------------------
def _reference(x_nchw, params, cfg):
    x = jnp.transpose(x_nchw, (0, 2, 3, 1))
    h1 = jnp.maximum(
        jnp.einsum("nhwc,cm->nhwm", x, params["w1"]) * params["s1"]
        + params["b1"], 0.0)
    k, mid, dil, st = cfg["k"], cfg["mid"], cfg["dilation"], cfg["stride"]
    w_dw = params["w2"].reshape(k, k, mid)[:, :, None, :]  # HWIO, I = 1
    pad = (k - 1) * dil // 2
    h2 = lax.conv_general_dilated(
        h1, w_dw, window_strides=(st, st), padding=((pad, pad), (pad, pad)),
        rhs_dilation=(dil, dil), dimension_numbers=("NHWC", "HWIO", "NHWC"),
        feature_group_count=mid)
    h2 = jnp.maximum(h2 * params["s2"] + params["b2"], 0.0)
    out = (jnp.einsum("nhwc,co->nhwo", h2, params["w3"]) * params["s3"]
           + params["b3"])
    if cfg["in_channels"] == cfg["out_channels"] and cfg["stride"] == 1:
        out = out + x
    return jnp.transpose(out, (0, 3, 1, 2))


if __name__ == "__main__":
    key = jax.random.PRNGKey(0)

    # (cin, cout, expansion, k, stride, dil, H, tile_rows, matmul_dtype, tol)
    tests = [
        (4, 4, 2, 3, 1, 1, 16, 8,    jnp.float32,  5e-4),  # residual, 2 row tiles
        (4, 8, 2, 3, 1, 1, 16, None, jnp.float32,  5e-4),  # no residual, auto tile
        (4, 4, 2, 3, 1, 1, 16, 16,   jnp.bfloat16, 1e-1),  # bf16 MXU + bf16 slab
        (4, 4, 2, 3, 1, 9, 32, 8,    jnp.float32,  5e-4),  # big dilation: pad>tile
    ]
    for idx, (cin, cout, exp, ksz, stride, dil, H, tr, mdt, tol) in enumerate(tests):
        kx, kp = jax.random.split(jax.random.fold_in(key, idx))
        cfg = dict(in_channels=cin, out_channels=cout, mid=cin * exp, k=ksz,
                   stride=stride, dilation=dil, groups=1)
        x = jax.random.normal(kx, (2, cin, H, H), jnp.float32)  # NCHW
        params = init_params(kp, cin, cout, exp, ksz)

        out = jax.block_until_ready(
            mbblock_forward(x, params, cfg, tile_rows=tr, matmul_dtype=mdt))
        ref = _reference(x, params, cfg)
        np.testing.assert_allclose(np.asarray(out), np.asarray(ref),
                                   atol=tol, rtol=tol)
        pad = (ksz - 1) * dil // 2
        Ho = (H + 2 * pad - dil * (ksz - 1) - 1) // stride + 1
        assert out.shape == (2, cout, Ho, Ho)
    print("KERNEL_OK")
</pallas_src>

<mosaic_0001>
module attributes {stable_mosaic.version = 11 : i64} {
  func.func @_mbblock_kernel(%arg0: i32, %arg1: i32, %arg2: memref<1x16x64xf32, #tpu.memory_space<vmem>>, %arg3: memref<64x128xf32, #tpu.memory_space<vmem>>, %arg4: memref<1x128xf32, #tpu.memory_space<vmem>>, %arg5: memref<9x128xf32, #tpu.memory_space<vmem>>, %arg6: memref<1x128xf32, #tpu.memory_space<vmem>>, %arg7: memref<128x64xf32, #tpu.memory_space<vmem>>, %arg8: memref<1x64xf32, #tpu.memory_space<vmem>>, %arg9: memref<1x8x64xf32, #tpu.memory_space<vmem>>, %arg10: memref<18x64xf32, #tpu.memory_space<vmem>>, %arg11: memref<10x144xf32, #tpu.memory_space<vmem>>) attributes {dimension_semantics = [#tpu.dimension_semantics<parallel>, #tpu.dimension_semantics<parallel>], iteration_bounds = array<i64: 2, 2>, scalar_prefetch = 0 : i64, scratch_operands = 2 : i64, tpu.core_type = #tpu.core_type<tc>, window_params = [{transform_indices = @transform_0, window_bounds = array<i64: 1, 16, 64>}, {pipeline_mode = #tpu.pipeline_mode<synchronous>, transform_indices = @transform_1, window_bounds = array<i64: 64, 128>}, {pipeline_mode = #tpu.pipeline_mode<synchronous>, transform_indices = @transform_2, window_bounds = array<i64: 1, 128>}, {pipeline_mode = #tpu.pipeline_mode<synchronous>, transform_indices = @transform_3, window_bounds = array<i64: 9, 128>}, {pipeline_mode = #tpu.pipeline_mode<synchronous>, transform_indices = @transform_4, window_bounds = array<i64: 1, 128>}, {pipeline_mode = #tpu.pipeline_mode<synchronous>, transform_indices = @transform_5, window_bounds = array<i64: 128, 64>}, {pipeline_mode = #tpu.pipeline_mode<synchronous>, transform_indices = @transform_6, window_bounds = array<i64: 1, 64>}, {transform_indices = @transform_7, window_bounds = array<i64: 1, 8, 64>}]} {
    %cst = arith.constant 0.000000e+00 : f32
    %0 = vector.broadcast %cst : f32 to vector<1x64xf32>
    %c0 = arith.constant 0 : index
    %c0_0 = arith.constant 0 : index
    %1 = vector.load %arg10[%c0, %c0_0] : memref<18x64xf32, #tpu.memory_space<vmem>>, vector<1x64xf32>
    tpu.vector_store %arg10[%c0, %c0_0], %0 {strides = array<i32>} : memref<18x64xf32, #tpu.memory_space<vmem>>, vector<1x64xf32>,
    %c17 = arith.constant 17 : index
    %c0_1 = arith.constant 0 : index
    %2 = vector.load %arg10[%c17, %c0_1] : memref<18x64xf32, #tpu.memory_space<vmem>>, vector<1x64xf32>
    tpu.vector_store %arg10[%c17, %c0_1], %0 {strides = array<i32>} : memref<18x64xf32, #tpu.memory_space<vmem>>, vector<1x64xf32>,
    %c0_2 = arith.constant 0 : index
    %c0_3 = arith.constant 0 : index
    %c0_4 = arith.constant 0 : index
    %3 = vector.load %arg2[%c0_2, %c0_3, %c0_4] : memref<1x16x64xf32, #tpu.memory_space<vmem>>, vector<1x16x64xf32>
    %4 = vector.shape_cast %3 : vector<1x16x64xf32> to vector<16x64xf32>
    %c1 = arith.constant 1 : index
    %c0_5 = arith.constant 0 : index
    %5 = vector.load %arg10[%c1, %c0_5] : memref<18x64xf32, #tpu.memory_space<vmem>>, vector<16x64xf32>
    tpu.vector_store %arg10[%c1, %c0_5], %4 {strides = array<i32>} : memref<18x64xf32, #tpu.memory_space<vmem>>, vector<16x64xf32>,
    %c8_i32 = arith.constant 8 : i32
    %6 = arith.muli %arg1, %c8_i32 : i32
    %7 = tpu.assume_multiple %6, 8 : i32
    %8 = arith.index_cast %7 : i32 to index
    %c0_6 = arith.constant 0 : index
    %9 = vector.load %arg10[%8, %c0_6] : memref<18x64xf32, #tpu.memory_space<vmem>>, vector<10x64xf32>
    %c0_7 = arith.constant 0 : index
    %c0_8 = arith.constant 0 : index
    %10 = vector.load %arg3[%c0_7, %c0_8] : memref<64x128xf32, #tpu.memory_space<vmem>>, vector<64x128xf32>
    %cst_9 = arith.constant dense<0.000000e+00> : vector<10x128xf32>
    %11 = tpu.matmul %9, %10, %cst_9 {dimension_numbers = #tpu.dot_dimension_numbers<[1], [0], [0], [1], [0, 0, 1, 1], [], []>} : vector<10x64xf32>, vector<64x128xf32>, vector<10x128xf32> -> vector<10x128xf32>
    %c0_10 = arith.constant 0 : index
    %c0_11 = arith.constant 0 : index
    %12 = vector.load %arg4[%c0_10, %c0_11] : memref<1x128xf32, #tpu.memory_space<vmem>>, vector<1x128xf32>
    %13 = vector.broadcast %12 : vector<1x128xf32> to vector<10x128xf32>
    %14 = arith.addf %11, %13 : vector<10x128xf32>
    %cst_12 = arith.constant 0.000000e+00 : f32
    %15 = vector.broadcast %cst_12 : f32 to vector<10x128xf32>
    %16 = arith.maximumf %14, %15 : vector<10x128xf32>
    %17 = tpu.iota {dimensions = array<i32: 0>} : vector<10x1xi32>
    %18 = vector.broadcast %6 : i32 to vector<10x1xi32>
    %19 = arith.addi %18, %17 : vector<10x1xi32>
    %c1_i32 = arith.constant 1 : i32
    %20 = vector.broadcast %c1_i32 : i32 to vector<10x1xi32>
    %21 = arith.cmpi sge, %19, %20 : vector<10x1xi32>
    %c17_i32 = arith.constant 17 : i32
    %22 = vector.broadcast %c17_i32 : i32 to vector<10x1xi32>
    %23 = arith.cmpi slt, %19, %22 : vector<10x1xi32>
    %24 = arith.andi %21, %23 : vector<10x1xi1>
    %cst_13 = arith.constant 0.000000e+00 : f32
    %25 = vector.shape_cast %24 : vector<10x1xi1> to vector<10x1xi1>
    %26 = vector.broadcast %25 : vector<10x1xi1> to vector<10x128xi1>
    %27 = vector.broadcast %cst_13 : f32 to vector<10x128xf32>
    %28 = arith.select %26, %16, %27 : vector<10x128xi1>, vector<10x128xf32>
    %cst_14 = arith.constant 0.000000e+00 : f32
    %29 = vector.broadcast %cst_14 : f32 to vector<10x8xf32>
    %c0_15 = arith.constant 0 : index
    %c0_16 = arith.constant 0 : index
    %30 = vector.load %arg11[%c0_15, %c0_16] : memref<10x144xf32, #tpu.memory_space<vmem>>, vector<10x8xf32>
    tpu.vector_store %arg11[%c0_15, %c0_16], %29 {strides = array<i32>} : memref<10x144xf32, #tpu.memory_space<vmem>>, vector<10x8xf32>,
    %c0_17 = arith.constant 0 : index
    %c136 = arith.constant 136 : index
    %31 = vector.load %arg11[%c0_17, %c136] : memref<10x144xf32, #tpu.memory_space<vmem>>, vector<10x8xf32>
    tpu.vector_store %arg11[%c0_17, %c136], %29 {strides = array<i32>} : memref<10x144xf32, #tpu.memory_space<vmem>>, vector<10x8xf32>,
    %c0_18 = arith.constant 0 : index
    %c8 = arith.constant 8 : index
    %32 = vector.load %arg11[%c0_18, %c8] : memref<10x144xf32, #tpu.memory_space<vmem>>, vector<10x128xf32>
    tpu.vector_store %arg11[%c0_18, %c8], %28 {strides = array<i32>} : memref<10x144xf32, #tpu.memory_space<vmem>>, vector<10x128xf32>,
    %c0_19 = arith.constant 0 : index
    %c0_20 = arith.constant 0 : index
    %33 = vector.load %arg5[%c0_19, %c0_20] : memref<9x128xf32, #tpu.memory_space<vmem>>, vector<9x128xf32>
    %cst_21 = arith.constant 0.000000e+00 : f32
    %34 = vector.broadcast %cst_21 : f32 to vector<8x128xf32>
    %c0_22 = arith.constant 0 : index
    %c0_23 = arith.constant 0 : index
    %35 = vector.load %arg11[%c0_22, %c0_23] : memref<10x144xf32, #tpu.memory_space<vmem>>, vector<8x144xf32>
    %36 = vector.extract_strided_slice %35 {offsets = [0, 0], sizes = [8, 128], strides = [1, 1]} : vector<8x144xf32> to vector<8x128xf32>
    %37 = vector.extract_strided_slice %33 {offsets = [0, 0], sizes = [1, 128], strides = [1, 1]} : vector<9x128xf32> to vector<1x128xf32>
    %38 = vector.shape_cast %37 : vector<1x128xf32> to vector<128xf32>
    %39 = vector.shape_cast %38 : vector<128xf32> to vector<1x128xf32>
    %40 = vector.broadcast %39 : vector<1x128xf32> to vector<8x128xf32>
    %41 = arith.mulf %36, %40 : vector<8x128xf32>
    %42 = arith.addf %34, %41 : vector<8x128xf32>
    %43 = vector.extract_strided_slice %35 {offsets = [0, 8], sizes = [8, 128], strides = [1, 1]} : vector<8x144xf32> to vector<8x128xf32>
    %44 = vector.extract_strided_slice %33 {offsets = [1, 0], sizes = [1, 128], strides = [1, 1]} : vector<9x128xf32> to vector<1x128xf32>
    %45 = vector.shape_cast %44 : vector<1x128xf32> to vector<128xf32>
    %46 = vector.shape_cast %45 : vector<128xf32> to vector<1x128xf32>
    %47 = vector.broadcast %46 : vector<1x128xf32> to vector<8x128xf32>
    %48 = arith.mulf %43, %47 : vector<8x128xf32>
    %49 = arith.addf %42, %48 : vector<8x128xf32>
    %50 = vector.extract_strided_slice %35 {offsets = [0, 16], sizes = [8, 128], strides = [1, 1]} : vector<8x144xf32> to vector<8x128xf32>
    %51 = vector.extract_strided_slice %33 {offsets = [2, 0], sizes = [1, 128], strides = [1, 1]} : vector<9x128xf32> to vector<1x128xf32>
    %52 = vector.shape_cast %51 : vector<1x128xf32> to vector<128xf32>
    %53 = vector.shape_cast %52 : vector<128xf32> to vector<1x128xf32>
    %54 = vector.broadcast %53 : vector<1x128xf32> to vector<8x128xf32>
    %55 = arith.mulf %50, %54 : vector<8x128xf32>
    %56 = arith.addf %49, %55 : vector<8x128xf32>
    %c1_24 = arith.constant 1 : index
    %c0_25 = arith.constant 0 : index
    %57 = vector.load %arg11[%c1_24, %c0_25] : memref<10x144xf32, #tpu.memory_space<vmem>>, vector<8x144xf32>
    %58 = vector.extract_strided_slice %57 {offsets = [0, 0], sizes = [8, 128], strides = [1, 1]} : vector<8x144xf32> to vector<8x128xf32>
    %59 = vector.extract_strided_slice %33 {offsets = [3, 0], sizes = [1, 128], strides = [1, 1]} : vector<9x128xf32> to vector<1x128xf32>
    %60 = vector.shape_cast %59 : vector<1x128xf32> to vector<128xf32>
    %61 = vector.shape_cast %60 : vector<128xf32> to vector<1x128xf32>
    %62 = vector.broadcast %61 : vector<1x128xf32> to vector<8x128xf32>
    %63 = arith.mulf %58, %62 : vector<8x128xf32>
    %64 = arith.addf %56, %63 : vector<8x128xf32>
    %65 = vector.extract_strided_slice %57 {offsets = [0, 8], sizes = [8, 128], strides = [1, 1]} : vector<8x144xf32> to vector<8x128xf32>
    %66 = vector.extract_strided_slice %33 {offsets = [4, 0], sizes = [1, 128], strides = [1, 1]} : vector<9x128xf32> to vector<1x128xf32>
    %67 = vector.shape_cast %66 : vector<1x128xf32> to vector<128xf32>
    %68 = vector.shape_cast %67 : vector<128xf32> to vector<1x128xf32>
    %69 = vector.broadcast %68 : vector<1x128xf32> to vector<8x128xf32>
    %70 = arith.mulf %65, %69 : vector<8x128xf32>
    %71 = arith.addf %64, %70 : vector<8x128xf32>
    %72 = vector.extract_strided_slice %57 {offsets = [0, 16], sizes = [8, 128], strides = [1, 1]} : vector<8x144xf32> to vector<8x128xf32>
    %73 = vector.extract_strided_slice %33 {offsets = [5, 0], sizes = [1, 128], strides = [1, 1]} : vector<9x128xf32> to vector<1x128xf32>
    %74 = vector.shape_cast %73 : vector<1x128xf32> to vector<128xf32>
    %75 = vector.shape_cast %74 : vector<128xf32> to vector<1x128xf32>
    %76 = vector.broadcast %75 : vector<1x128xf32> to vector<8x128xf32>
    %77 = arith.mulf %72, %76 : vector<8x128xf32>
    %78 = arith.addf %71, %77 : vector<8x128xf32>
    %c2 = arith.constant 2 : index
    %c0_26 = arith.constant 0 : index
    %79 = vector.load %arg11[%c2, %c0_26] : memref<10x144xf32, #tpu.memory_space<vmem>>, vector<8x144xf32>
    %80 = vector.extract_strided_slice %79 {offsets = [0, 0], sizes = [8, 128], strides = [1, 1]} : vector<8x144xf32> to vector<8x128xf32>
    %81 = vector.extract_strided_slice %33 {offsets = [6, 0], sizes = [1, 128], strides = [1, 1]} : vector<9x128xf32> to vector<1x128xf32>
    %82 = vector.shape_cast %81 : vector<1x128xf32> to vector<128xf32>
    %83 = vector.shape_cast %82 : vector<128xf32> to vector<1x128xf32>
    %84 = vector.broadcast %83 : vector<1x128xf32> to vector<8x128xf32>
    %85 = arith.mulf %80, %84 : vector<8x128xf32>
    %86 = arith.addf %78, %85 : vector<8x128xf32>
    %87 = vector.extract_strided_slice %79 {offsets = [0, 8], sizes = [8, 128], strides = [1, 1]} : vector<8x144xf32> to vector<8x128xf32>
    %88 = vector.extract_strided_slice %33 {offsets = [7, 0], sizes = [1, 128], strides = [1, 1]} : vector<9x128xf32> to vector<1x128xf32>
    %89 = vector.shape_cast %88 : vector<1x128xf32> to vector<128xf32>
    %90 = vector.shape_cast %89 : vector<128xf32> to vector<1x128xf32>
    %91 = vector.broadcast %90 : vector<1x128xf32> to vector<8x128xf32>
    %92 = arith.mulf %87, %91 : vector<8x128xf32>
    %93 = arith.addf %86, %92 : vector<8x128xf32>
    %94 = vector.extract_strided_slice %79 {offsets = [0, 16], sizes = [8, 128], strides = [1, 1]} : vector<8x144xf32> to vector<8x128xf32>
    %95 = vector.extract_strided_slice %33 {offsets = [8, 0], sizes = [1, 128], strides = [1, 1]} : vector<9x128xf32> to vector<1x128xf32>
    %96 = vector.shape_cast %95 : vector<1x128xf32> to vector<128xf32>
    %97 = vector.shape_cast %96 : vector<128xf32> to vector<1x128xf32>
    %98 = vector.broadcast %97 : vector<1x128xf32> to vector<8x128xf32>
    %99 = arith.mulf %94, %98 : vector<8x128xf32>
    %100 = arith.addf %93, %99 : vector<8x128xf32>
    %c0_27 = arith.constant 0 : index
    %c0_28 = arith.constant 0 : index
    %101 = vector.load %arg6[%c0_27, %c0_28] : memref<1x128xf32, #tpu.memory_space<vmem>>, vector<1x128xf32>
    %102 = vector.broadcast %101 : vector<1x128xf32> to vector<8x128xf32>
    %103 = arith.addf %100, %102 : vector<8x128xf32>
    %cst_29 = arith.constant 0.000000e+00 : f32
    %104 = vector.broadcast %cst_29 : f32 to vector<8x128xf32>
    %105 = arith.maximumf %103, %104 : vector<8x128xf32>
    %c0_30 = arith.constant 0 : index
    %c0_31 = arith.constant 0 : index
    %106 = vector.load %arg7[%c0_30, %c0_31] : memref<128x64xf32, #tpu.memory_space<vmem>>, vector<128x64xf32>
    %cst_32 = arith.constant dense<0.000000e+00> : vector<8x64xf32>
    %107 = tpu.matmul %105, %106, %cst_32 {dimension_numbers = #tpu.dot_dimension_numbers<[1], [0], [0], [1], [0, 0, 1, 1], [], []>} : vector<8x128xf32>, vector<128x64xf32>, vector<8x64xf32> -> vector<8x64xf32>
    %c0_33 = arith.constant 0 : index
    %c0_34 = arith.constant 0 : index
    %108 = vector.load %arg8[%c0_33, %c0_34] : memref<1x64xf32, #tpu.memory_space<vmem>>, vector<1x64xf32>
    %109 = vector.broadcast %108 : vector<1x64xf32> to vector<8x64xf32>
    %110 = arith.addf %107, %109 : vector<8x64xf32>
    %c8_i32_35 = arith.constant 8 : i32
    %111 = arith.muli %arg1, %c8_i32_35 : i32
    %112 = tpu.assume_multiple %111, 8 : i32
    %c0_36 = arith.constant 0 : index
    %113 = arith.index_cast %112 : i32 to index
    %c0_37 = arith.constant 0 : index
    %114 = vector.load %arg2[%c0_36, %113, %c0_37] : memref<1x16x64xf32, #tpu.memory_space<vmem>>, vector<1x8x64xf32>
    %115 = vector.shape_cast %114 : vector<1x8x64xf32> to vector<8x64xf32>
    %116 = arith.addf %110, %115 : vector<8x64xf32>
    %c0_38 = arith.constant 0 : index
    %c0_39 = arith.constant 0 : index
    %c0_40 = arith.constant 0 : index
    %117 = vector.load %arg9[%c0_38, %c0_39, %c0_40] : memref<1x8x64xf32, #tpu.memory_space<vmem>>, vector<1x8x64xf32>
    %118 = vector.shape_cast %117 : vector<1x8x64xf32> to vector<8x64xf32>
    %119 = vector.shape_cast %116 : vector<8x64xf32> to vector<1x8x64xf32>
    tpu.vector_store %arg9[%c0_38, %c0_39, %c0_40], %119 {strides = array<i32>} : memref<1x8x64xf32, #tpu.memory_space<vmem>>, vector<1x8x64xf32>,
    return
  }
  func.func @transform_0(%arg0: i32, %arg1: i32) -> (i32, i32, i32) {
    %c0_i32 = arith.constant 0 : i32
    %c0_i32_0 = arith.constant 0 : i32
    %c0_i32_1 = arith.constant 0 : i32
    return %arg0, %c0_i32, %c0_i32_0 : i32, i32, i32
  }
  func.func @transform_1(%arg0: i32, %arg1: i32) -> (i32, i32) {
    %c0_i32 = arith.constant 0 : i32
    %c0_i32_0 = arith.constant 0 : i32
    %c0_i32_1 = arith.constant 0 : i32
    return %c0_i32, %c0_i32_0 : i32, i32
  }
  func.func @transform_2(%arg0: i32, %arg1: i32) -> (i32, i32) {
    %c0_i32 = arith.constant 0 : i32
    %c0_i32_0 = arith.constant 0 : i32
    %c0_i32_1 = arith.constant 0 : i32
    return %c0_i32, %c0_i32_0 : i32, i32
  }
  func.func @transform_3(%arg0: i32, %arg1: i32) -> (i32, i32) {
    %c0_i32 = arith.constant 0 : i32
    %c0_i32_0 = arith.constant 0 : i32
    %c0_i32_1 = arith.constant 0 : i32
    return %c0_i32, %c0_i32_0 : i32, i32
  }
  func.func @transform_4(%arg0: i32, %arg1: i32) -> (i32, i32) {
    %c0_i32 = arith.constant 0 : i32
    %c0_i32_0 = arith.constant 0 : i32
    %c0_i32_1 = arith.constant 0 : i32
    return %c0_i32, %c0_i32_0 : i32, i32
  }
  func.func @transform_5(%arg0: i32, %arg1: i32) -> (i32, i32) {
    %c0_i32 = arith.constant 0 : i32
    %c0_i32_0 = arith.constant 0 : i32
    %c0_i32_1 = arith.constant 0 : i32
    return %c0_i32, %c0_i32_0 : i32, i32
  }
  func.func @transform_6(%arg0: i32, %arg1: i32) -> (i32, i32) {
    %c0_i32 = arith.constant 0 : i32
    %c0_i32_0 = arith.constant 0 : i32
    %c0_i32_1 = arith.constant 0 : i32
    return %c0_i32, %c0_i32_0 : i32, i32
  }
  func.func @transform_7(%arg0: i32, %arg1: i32) -> (i32, i32, i32) {
    %c0_i32 = arith.constant 0 : i32
    %c0_i32_0 = arith.constant 0 : i32
    return %arg0, %arg1, %c0_i32 : i32, i32, i32
  }
}

</mosaic_0001>

<llo_original>
// kernel: tpu_custom_call.1
$region0: #{tpu_custom_call.1}
  #allocation0 [shape = 'u32[]', space=smem, size = 0x4, offset = 0x4, fixed_abs, tag = 'smem constant byte address 0x4 - core index']
  #allocation1 [shape = 'u32[144,128]{1,0:T(1,128)}', space=vmem, size = 0x12000, scoped, tag = 'internal scratch']
  #allocation2 [shape = 'f32[18,64]{1,0:T(8,128)}', space=vmem, size = 0x3000, scoped, tag = 'scratch operand']
  #allocation3 [shape = 'f32[10,144]{1,0:T(8,128)}', space=vmem, size = 0x4000, scoped, tag = 'scratch operand']
  %s0 = inlined_call_operand.vmem [shape: f32[2,16,64], index: 0, kind: input, shape index: {}]
  %s1 = inlined_call_operand.vmem [shape: f32[64,128], index: 1, kind: input, shape index: {}]
  %s2 = inlined_call_operand.vmem [shape: f32[1,128], index: 2, kind: input, shape index: {}]
  %s3 = inlined_call_operand.vmem [shape: f32[9,128], index: 3, kind: input, shape index: {}]
  %s4 = inlined_call_operand.vmem [shape: f32[1,128], index: 4, kind: input, shape index: {}]
  %s5 = inlined_call_operand.vmem [shape: f32[128,64], index: 5, kind: input, shape index: {}]
  %s6 = inlined_call_operand.vmem [shape: f32[1,64], index: 6, kind: input, shape index: {}]
  %s7 = inlined_call_operand.hbm [shape: f32[2,16,64], index: 7, kind: output, shape index: {}]
  %s8 = sld [smem:[#allocation0]]
  $region61: #{tpu_custom_call.1} parent=0
    _
  %s10 = ssub.s32 1, %s8
  %s11 = scalar_select 0, %s10, %s8
  $region1: #{tpu_custom_call.1} parent=0
    #allocation4 [shape = 'u8[8192]{0}', space=vmem, size = 0x2000, scoped, tag = 'output window, operand 0']
    #allocation5 [shape = 's32[2]{0}', space=sflag, size = 0x8, scoped, tag = 'scoped memory for tpu_custom_call.1']
    %12 = vsyncpa [#allocation5], 0
    %s13 = scalar_lea.sflag [#allocation5], 1
    %14 = vsyncpa %s13, 0
    loop: start=0, step=1, limit=6
    $region2: #{tpu_custom_call.1} parent=1 // loop_pre_header
      _
    $region3: #{tpu_custom_call.1} parent=1 // loop_header
      %s16 = sphi 0, %s20
      %p17 = scmp.ge.s32.totalorder %s16, 6
      %s23 = sphi 0, %s35
      %s24 = sphi 0, %s31
      %s25 = sphi 0, %s23
      %s26 = sphi 0, %s24
      %s27 = sphi 0, %s25
      %s28 = sphi 0, %s26
      %s38 = sphi 0, %s40
      %s41 = sphi 0, %s38
      %s42 = sphi 0, %s41
      %s58 = sphi 0, %s42
      %s62 = sphi 0, %s62
      %s64 = sphi 0, %s62
      %s65 = sphi 0, %s64
      %s79 = sphi 0, %s65
      %s83 = sphi 0, %s83
      %s85 = sphi 0, %s83
      %s86 = sphi 0, %s85
      %s100 = sphi 0, %s86
      %s104 = sphi 0, %s104
      %s106 = sphi 0, %s104
      %s107 = sphi 0, %s106
      %s121 = sphi 0, %s107
      %s125 = sphi 0, %s125
      %s127 = sphi 0, %s125
      %s128 = sphi 0, %s127
      %s142 = sphi 0, %s128
      %s146 = sphi 0, %s146
      %s148 = sphi 0, %s146
      %s149 = sphi 0, %s148
      %s163 = sphi 0, %s149
      %s167 = sphi 0, %s167
      %s169 = sphi 0, %s167
      %s170 = sphi 0, %s169
      %s184 = sphi 0, %s170
      %s192 = sphi 0, %s194
      %s195 = sphi 0, %s192
      %s196 = sphi 0, %s195
      %s212 = sphi 0, %s196
    $region4: #{tpu_custom_call.1} parent=1 // loop_header_branch
      %19 = sbr.rel (%p17) target = $region8
    $region5: #{tpu_custom_call.1} parent=1 // loop_body
      %s21 = ssub.s32 %s16, 1
      %s22 = ssub.s32 %s16, 2
      %s29 = sadd.s32 1, %s24
      %p30 = scmp.ge.s32.totalorder %s29, 2
      %s31 = scalar_select %p30, 0, %s29
      %s32 = sadd.s32 1, %s23
      %s33 = scalar_select %p30, %s32, %s23
      %p34 = scmp.ge.s32.totalorder %s33, 2
      %s35 = scalar_select %p34, 0, %s33
      %s36 = ssub.s32 %s23, %s35
      %p37 = scmp.eq.s32.totalorder %s36, 0
      %s39 = sadd.s32 %s38, 1
      %s40 = scalar_select %p37, %s38, %s39
      %p43 = pneg %p37
      %p44 = scmp.eq.s32.totalorder %s16, 3
      %p45 = por %p43, %p44
      %p46 = scmp.ne.s32.totalorder %s38, %s41
      %p47 = scmp.eq.s32.totalorder %s16, 0
      %p48 = por %p46, %p47
      %p49 = scmp.ne.s32.totalorder %s38, %s41
      %p50 = scmp.eq.s32.totalorder %s21, 3
      %p51 = por %p49, %p50
      %p52 = scmp.ne.s32.totalorder %s41, %s42
      %p53 = scmp.eq.s32.totalorder %s21, 0
      %p54 = por %p52, %p53
      %p55 = scmp.ne.s32.totalorder %s41, %s42
      %p56 = scmp.eq.s32.totalorder %s22, 3
      %p57 = por %p55, %p56
      %p59 = scmp.ne.s32.totalorder %s42, %s58
      %p60 = scmp.eq.s32.totalorder %s22, 0
      %p61 = por %p59, %p60
      %s63 = sadd.s32 %s62, 1
      %p66 = scmp.eq.s32.totalorder %s16, 3
      %p67 = scmp.ne.s32.totalorder %s62, %s64
      %p68 = scmp.eq.s32.totalorder %s16, 0
      %p69 = por %p67, %p68
      %p70 = scmp.ne.s32.totalorder %s62, %s64
      %p71 = scmp.eq.s32.totalorder %s21, 3
      %p72 = por %p70, %p71
      %p73 = scmp.ne.s32.totalorder %s64, %s65
      %p74 = scmp.eq.s32.totalorder %s21, 0
      %p75 = por %p73, %p74
      %p76 = scmp.ne.s32.totalorder %s64, %s65
      %p77 = scmp.eq.s32.totalorder %s22, 3
      %p78 = por %p76, %p77
      %p80 = scmp.ne.s32.totalorder %s65, %s79
      %p81 = scmp.eq.s32.totalorder %s22, 0
      %p82 = por %p80, %p81
      %s84 = sadd.s32 %s83, 1
      %p87 = scmp.eq.s32.totalorder %s16, 3
      %p88 = scmp.ne.s32.totalorder %s83, %s85
      %p89 = scmp.eq.s32.totalorder %s16, 0
      %p90 = por %p88, %p89
      %p91 = scmp.ne.s32.totalorder %s83, %s85
      %p92 = scmp.eq.s32.totalorder %s21, 3
      %p93 = por %p91, %p92
      %p94 = scmp.ne.s32.totalorder %s85, %s86
      %p95 = scmp.eq.s32.totalorder %s21, 0
      %p96 = por %p94, %p95
      %p97 = scmp.ne.s32.totalorder %s85, %s86
      %p98 = scmp.eq.s32.totalorder %s22, 3
      %p99 = por %p97, %p98
      %p101 = scmp.ne.s32.totalorder %s86, %s100
      %p102 = scmp.eq.s32.totalorder %s22, 0
      %p103 = por %p101, %p102
      %s105 = sadd.s32 %s104, 1
      %p108 = scmp.eq.s32.totalorder %s16, 3
      %p109 = scmp.ne.s32.totalorder %s104, %s106
      %p110 = scmp.eq.s32.totalorder %s16, 0
      %p111 = por %p109, %p110
      %p112 = scmp.ne.s32.totalorder %s104, %s106
      %p113 = scmp.eq.s32.totalorder %s21, 3
      %p114 = por %p112, %p113
      %p115 = scmp.ne.s32.totalorder %s106, %s107
      %p116 = scmp.eq.s32.totalorder %s21, 0
      %p117 = por %p115, %p116
      %p118 = scmp.ne.s32.totalorder %s106, %s107
      %p119 = scmp.eq.s32.totalorder %s22, 3
      %p120 = por %p118, %p119
      %p122 = scmp.ne.s32.totalorder %s107, %s121
      %p123 = scmp.eq.s32.totalorder %s22, 0
      %p124 = por %p122, %p123
      %s126 = sadd.s32 %s125, 1
      %p129 = scmp.eq.s32.totalorder %s16, 3
      %p130 = scmp.ne.s32.totalorder %s125, %s127
      %p131 = scmp.eq.s32.totalorder %s16, 0
      %p132 = por %p130, %p131
      %p133 = scmp.ne.s32.totalorder %s125, %s127
      %p134 = scmp.eq.s32.totalorder %s21, 3
      %p135 = por %p133, %p134
      %p136 = scmp.ne.s32.totalorder %s127, %s128
      %p137 = scmp.eq.s32.totalorder %s21, 0
      %p138 = por %p136, %p137
      %p139 = scmp.ne.s32.totalorder %s127, %s128
      %p140 = scmp.eq.s32.totalorder %s22, 3
      %p141 = por %p139, %p140
      %p143 = scmp.ne.s32.totalorder %s128, %s142
      %p144 = scmp.eq.s32.totalorder %s22, 0
      %p145 = por %p143, %p144
      %s147 = sadd.s32 %s146, 1
      %p150 = scmp.eq.s32.totalorder %s16, 3
      %p151 = scmp.ne.s32.totalorder %s146, %s148
      %p152 = scmp.eq.s32.totalorder %s16, 0
      %p153 = por %p151, %p152
      %p154 = scmp.ne.s32.totalorder %s146, %s148
      %p155 = scmp.eq.s32.totalorder %s21, 3
      %p156 = por %p154, %p155
      %p157 = scmp.ne.s32.totalorder %s148, %s149
      %p158 = scmp.eq.s32.totalorder %s21, 0
      %p159 = por %p157, %p158
      %p160 = scmp.ne.s32.totalorder %s148, %s149
      %p161 = scmp.eq.s32.totalorder %s22, 3
      %p162 = por %p160, %p161
      %p164 = scmp.ne.s32.totalorder %s149, %s163
      %p165 = scmp.eq.s32.totalorder %s22, 0
      %p166 = por %p164, %p165
      %s168 = sadd.s32 %s167, 1
      %p171 = scmp.eq.s32.totalorder %s16, 3
      %p172 = scmp.ne.s32.totalorder %s167, %s169
      %p173 = scmp.eq.s32.totalorder %s16, 0
      %p174 = por %p172, %p173
      %p175 = scmp.ne.s32.totalorder %s167, %s169
      %p176 = scmp.eq.s32.totalorder %s21, 3
      %p177 = por %p175, %p176
      %p178 = scmp.ne.s32.totalorder %s169, %s170
      %p179 = scmp.eq.s32.totalorder %s21, 0
      %p180 = por %p178, %p179
      %p181 = scmp.ne.s32.totalorder %s169, %s170
      %p182 = scmp.eq.s32.totalorder %s22, 3
      %p183 = por %p181, %p182
      %p185 = scmp.ne.s32.totalorder %s170, %s184
      %p186 = scmp.eq.s32.totalorder %s22, 0
      %p187 = por %p185, %p186
      %s188 = ssub.s32 %s23, %s35
      %s189 = ssub.s32 %s24, %s31
      %s190 = sor.u32 %s188, %s189
      %p191 = scmp.eq.s32.totalorder %s190, 0
      %s193 = sadd.s32 %s192, 1
      %s194 = scalar_select %p191, %s192, %s193
      %p197 = pneg %p191
      %p198 = scmp.eq.s32.totalorder %s16, 3
      %p199 = por %p197, %p198
      %p200 = scmp.ne.s32.totalorder %s192, %s195
      %p201 = scmp.eq.s32.totalorder %s16, 0
      %p202 = por %p200, %p201
      %p203 = scmp.ne.s32.totalorder %s192, %s195
      %p204 = scmp.eq.s32.totalorder %s21, 3
      %p205 = por %p203, %p204
      %p206 = scmp.ne.s32.totalorder %s195, %s196
      %p207 = scmp.eq.s32.totalorder %s21, 0
      %p208 = por %p206, %p207
      %p209 = scmp.ne.s32.totalorder %s195, %s196
      %p210 = scmp.eq.s32.totalorder %s22, 3
      %p211 = por %p209, %p210
      %p213 = scmp.ne.s32.totalorder %s196, %s212
      %p214 = scmp.eq.s32.totalorder %s22, 0
      %p215 = por %p213, %p214
      %p216 = scmp.le.s32.totalorder 1, %s16
      %p217 = scmp.lt.s32.totalorder %s16, 5
      %p218 = pnand %p216, %p217
      %p219 = pneg %p218
      // Predicated region
      $region9: #{tpu_custom_call.1} parent=5 // pred_check
        _
      $region10: #{tpu_custom_call.1} parent=5 // pred_check_branch
        %221 = sbr.rel (%p218) target = $region12
      $region11: #{tpu_custom_call.1} parent=5 // pred_region
        %s222 = ssub.s32 %s16, 1
        // Predicated region
        $region13: #{tpu_custom_call.1} parent=11 // pred_check
          %p223 = pneg %p75
        $region14: #{tpu_custom_call.1} parent=11 // pred_check_branch
          %225 = sbr.rel (%p223) target = $region16
        $region15: #{tpu_custom_call.1} parent=11 // pred_region
          _
        $region16: #{tpu_custom_call.1} parent=11 // pred_fallthru
          _
        // Predicated region
        $region17: #{tpu_custom_call.1} parent=11 // pred_check
          %p226 = pneg %p96
        $region18: #{tpu_custom_call.1} parent=11 // pred_check_branch
          %228 = sbr.rel (%p226) target = $region20
        $region19: #{tpu_custom_call.1} parent=11 // pred_region
          _
        $region20: #{tpu_custom_call.1} parent=11 // pred_fallthru
          _
        // Predicated region
        $region21: #{tpu_custom_call.1} parent=11 // pred_check
          %p229 = pneg %p117
        $region22: #{tpu_custom_call.1} parent=11 // pred_check_branch
          %231 = sbr.rel (%p229) target = $region24
        $region23: #{tpu_custom_call.1} parent=11 // pred_region
          _
        $region24: #{tpu_custom_call.1} parent=11 // pred_fallthru
          _
        // Predicated region
        $region25: #{tpu_custom_call.1} parent=11 // pred_check
          %p232 = pneg %p138
        $region26: #{tpu_custom_call.1} parent=11 // pred_check_branch
          %234 = sbr.rel (%p232) target = $region28
        $region27: #{tpu_custom_call.1} parent=11 // pred_region
          _
        $region28: #{tpu_custom_call.1} parent=11 // pred_fallthru
          _
        // Predicated region
        $region29: #{tpu_custom_call.1} parent=11 // pred_check
          %p235 = pneg %p159
        $region30: #{tpu_custom_call.1} parent=11 // pred_check_branch
          %237 = sbr.rel (%p235) target = $region32
        $region31: #{tpu_custom_call.1} parent=11 // pred_region
          _
        $region32: #{tpu_custom_call.1} parent=11 // pred_fallthru
          _
        // Predicated region
        $region33: #{tpu_custom_call.1} parent=11 // pred_check
          %p238 = pneg %p180
        $region34: #{tpu_custom_call.1} parent=11 // pred_check_branch
          %240 = sbr.rel (%p238) target = $region36
        $region35: #{tpu_custom_call.1} parent=11 // pred_region
          _
        $region36: #{tpu_custom_call.1} parent=11 // pred_fallthru
          _
      $region12: #{tpu_custom_call.1} parent=5 // pred_fallthru
        _
      %p241 = scmp.lt.s32.totalorder %s16, 4
      // Predicated region
      $region37: #{tpu_custom_call.1} parent=5 // pred_check
        %p242 = pneg %p241
      $region38: #{tpu_custom_call.1} parent=5 // pred_check_branch
        %244 = sbr.rel (%p242) target = $region40
      $region39: #{tpu_custom_call.1} parent=5 // pred_region
        // Predicated region
        $region41: #{tpu_custom_call.1} parent=39 // pred_check
          %p245 = pneg %p48
        $region42: #{tpu_custom_call.1} parent=39 // pred_check_branch
          %247 = sbr.rel (%p245) target = $region44
        $region43: #{tpu_custom_call.1} parent=39 // pred_region
          %p248 = scmp.lt.s32.totalorder %s23, 1
          %s249 = scalar_select %p248, %s23, 1
          %s250 = smul.addr %s249, 2
          %s251 = smul.addr %s250, 8
          %s252 = scalar_lea.vmem %s0, %s251
        $region44: #{tpu_custom_call.1} parent=39 // pred_fallthru
          _
      $region40: #{tpu_custom_call.1} parent=5 // pred_fallthru
        _
      %p253 = scmp.le.s32.totalorder 1, %s16
      %p254 = scmp.lt.s32.totalorder %s16, 5
      %p255 = pnand %p253, %p254
      %p256 = pneg %p255
      // Predicated region
      $region45: #{tpu_custom_call.1} parent=5 // pred_check
        _
      $region46: #{tpu_custom_call.1} parent=5 // pred_check_branch
        %258 = sbr.rel (%p255) target = $region48
      $region47: #{tpu_custom_call.1} parent=5 // pred_region
        %s259 = ssub.s32 %s16, 1
        %p260 = scmp.lt.s32.totalorder %s25, 1
        %s261 = scalar_select %p260, %s25, 1
        %s262 = smul.addr %s261, 2
        %s263 = smul.addr %s262, 8
        %s264 = scalar_lea.vmem %s0, %s263
        %p265 = pneg %p54
        %p266 = pneg %p51
        %p267 = pneg %p75
        %p268 = pneg %p72
        %p269 = pneg %p96
        %p270 = pneg %p93
        %p271 = pneg %p117
        %p272 = pneg %p114
        %p273 = pneg %p138
        %p274 = pneg %p135
        %p275 = pneg %p159
        %p276 = pneg %p156
        %p277 = pneg %p180
        %p278 = pneg %p177
        %p279 = pneg %p208
        %p280 = pneg %p205
        %s281 = sand.u32 %s195, 1
        %s282 = scalar_lea.sflag [#allocation5], %s281
        %s283 = sand.u32 %s195, 1
        %s284 = smul.addr %s283, 8
        %s285 = scalar_lea.vmem [#allocation4], %s284
        %p286 = scmp.lt.s32.totalorder %s25, 1
        %s287 = scalar_select %p286, %s25, 1
        %s288 = smul.addr %s287, 2
        %s289 = smul.addr %s288, 8
        %s290 = scalar_lea.vmem %s0, %s289
        %vm291 = vcmask 516096
        %292 = vst.msk [vmem:[#allocation2] sm:$0x1] %vm291, 0.0
        %293 = vst.msk [vmem:[#allocation2 + $0x11] sm:$0x1] %vm291, 0.0
        %v294 = vld [vmem:[%s290] sm:$0xff]
        %v295 = vld [vmem:[%s290 + $0x8] sm:$0xff]
        %vm296 = vcmask 523264
        %297 = vst.msk [vmem:[#allocation2 + $0x1] sm:$0xff] %vm296, %v294
        %298 = vst.msk [vmem:[#allocation2 + $0x9] sm:$0xff] %vm296, %v295
        %s299 = smul.u32 %s26, 8
        %s300 = scalar_lea.vmem [#allocation2], %s299
        %v301 = vld [vmem:[%s300] sm:$0xff]
        %v302 = vld [vmem:[%s300 + $0x8] sm:$0x3]
        %v303 = vld [vmem:[%s1] sm:$0xff]
        %v304 = vld [vmem:[%s1 + $0x8] sm:$0xff]
        %v305 = vld [vmem:[%s1 + $0x10] sm:$0xff]
        %v306 = vld [vmem:[%s1 + $0x18] sm:$0xff]
        %v307 = vld [vmem:[%s1 + $0x20] sm:$0xff]
        %v308 = vld [vmem:[%s1 + $0x28] sm:$0xff]
        %v309 = vld [vmem:[%s1 + $0x30] sm:$0xff]
        %v310 = vld [vmem:[%s1 + $0x38] sm:$0xff]
        %v311 = vld [vmem:[%s2] sm:$0x1]
        %v313 = vlaneseq
        %v314 = vshrl.u32 %v313, 7
        %v315 = vsub.s32 0, %v314
        %v316 = vrot.slane %v311, %v315
        %v319 = vsel %vm296, %v301, 0
        %v322 = vsel %vm296, %v302, 0
        %324 = vmatprep.subr.mxu0 0.0
        %325 = vmatpush1.msra.mxu0 %v303
        %326 = vmatprep.subr.mxu0 0.0
        %327 = vmatpush1.msra.mxu0 %v304
        %328 = vmatprep.subr.mxu0 0.0
        %329 = vmatpush1.msra.mxu0 %v305
        %330 = vmatprep.subr.mxu0 0.0
        %331 = vmatpush1.msra.mxu0 %v306
        %332 = vmatprep.subr.mxu0 0.0
        %333 = vmatpush1.msra.mxu0 %v307
        %334 = vmatprep.subr.mxu0 0.0
        %335 = vmatpush1.msra.mxu0 %v308
        %336 = vmatprep.subr.mxu0 0.0
        %337 = vmatpush1.msra.mxu0 %v309
        %338 = vmatprep.subr.mxu0 0.0
        %339 = vmatpush1.msra.mxu0 %v310
        %340 = vmatprep.subr.mxu0 0.0
        %341 = vmatpush1.msra.mxu0 0.0
        %342 = vmatprep.subr.mxu0 0.0
        %343 = vmatpush1.msra.mxu0 0.0
        %344 = vmatprep.subr.mxu0 0.0
        %345 = vmatpush1.msra.mxu0 0.0
        %346 = vmatprep.subr.mxu0 0.0
        %347 = vmatpush1.msra.mxu0 0.0
        %348 = vmatprep.subr.mxu0 0.0
        %349 = vmatpush1.msra.mxu0 0.0
        %350 = vmatprep.subr.mxu0 0.0
        %351 = vmatpush1.msra.mxu0 0.0
        %352 = vmatprep.subr.mxu0 0.0
        %353 = vmatpush1.msra.mxu0 0.0
        %354 = vmatprep.subr.mxu0 0.0
        %355 = vmatpush1.msra.mxu0 0.0
        %356 = vmatprep.subr.mxu0 0.0
        %357 = vmatpush1.msra.mxu0 0.0
        %358 = vmatprep.subr.mxu0 0.0
        %359 = vmatpush1.msra.mxu0 0.0
        %360 = vmatprep.subr.mxu0 0.0
        %361 = vmatpush1.msra.mxu0 0.0
        %362 = vmatprep.subr.mxu0 0.0
        %363 = vmatpush1.msra.mxu0 0.0
        %364 = vmatprep.subr.mxu0 0.0
        %365 = vmatpush1.msra.mxu0 0.0
        %366 = vmatprep.subr.mxu0 0.0
        %367 = vmatpush1.msra.mxu0 0.0
        %368 = vmatprep.subr.mxu0 0.0
        %369 = vmatpush1.msra.mxu0 0.0
        %370 = vmatprep.subr.mxu0 0.0
        %371 = vmatpush1.msra.mxu0 0.0
        %372 = vmatprep.subr.mxu0 0.0
        %373 = vmatpush1.msra.mxu0 0.0
        %374 = vmatprep.subr.mxu0 0.0
        %375 = vmatpush1.msra.mxu0 0.0
        %376 = vmatprep.subr.mxu0 0.0
        %377 = vmatpush1.msra.mxu0 0.0
        %378 = vmatprep.subr.mxu0 0.0
        %379 = vmatpush1.msra.mxu0 0.0
        %380 = vmatprep.subr.mxu0 0.0
        %381 = vmatpush1.msra.mxu0 0.0
        %382 = vmatprep.subr.mxu0 0.0
        %383 = vmatpush1.msra.mxu0 0.0
        %384 = vmatprep.subr.mxu0 0.0
        %385 = vmatpush1.msra.mxu0 0.0
        %386 = vmatprep.subr.mxu0 0.0
        %387 = vmatpush1.msra.mxu0 0.0
        %388 = vmatprep.mubr.f32.mxu0 0.0
        %389 = vmatmul.mubr.f32.gmra.mrb[0].mxu0 %v319
        %v390 = vpop.f32.mrb[0].mxu0
        %v391 = vadd.f32 %v316, %v390
        %v392 = vpop.f32.mrb[0].mxu0
        %393 = vmatprep.mubr.f32.mxu0 0.0
        %394 = vmatmul.mubr.f32.gmra.mrb[0].mxu0 %v322
        %v395 = vpop.f32.mrb[0].mxu0
        %v396 = vadd.f32 %v316, %v395
        %v397 = vpop.f32.mrb[0].mxu0
        %398 = vdwg.mxu0
        %v399 = vmax.f32 %v391, 0.0
        %v400 = vmax.f32 %v396, 0.0
        %v401 = vlaneseq
        %v402 = vshrl.u32 %v401, 7
        %v403 = vadd.s32 %v402, 8
        %v404 = vstv %s299
        %v405 = vadd.s32 %v404, %v402
        %v406 = vadd.s32 %v404, %v403
        %vm407 = vcmp.ge.s32.totalorder %v405, 1
        %vm408 = vcmp.ge.s32.totalorder %v406, 1
        %vm409 = vcmp.lt.s32.totalorder %v405, 17
        %vm410 = vcmp.lt.s32.totalorder %v406, 17
        %vm411 = vmand %vm407, %vm409
        %vm412 = vmand %vm408, %vm410
        %v413 = vsel %vm411, 1, 0
        %v414 = vsel %vm412, 1, 0
        %vm415 = vcmp.eq.s32.totalorder %v413, 1
        %vm416 = vcmp.eq.s32.totalorder %v414, 1
        %v417 = vsel %vm415, %v399, 0.0
        %v418 = vsel %vm416, %v400, 0.0
        %vm419 = vcmask 64512
        %420 = vst.msk [vmem:[#allocation3] sm:$0xff] %vm419, 0.0
        %vm421 = vcmask 58368
        %422 = vst.msk [vmem:[#allocation3 + $0x10] sm:$0x3] %vm421, 0.0
        %vm423 = vcmask 130112
        %424 = vst.msk [vmem:[#allocation3 + $0x8] sm:$0xff] %vm423, 0.0
        %vm425 = vcmask 123968
        %426 = vst.msk [vmem:[#allocation3 + $0x18] sm:$0x3] %vm425, 0.0
        %429 = vrot.lane.b32.xlu0 %v417, 8
        %v430 = vpop.permute.xlu0 %429
        %431 = vrot.lane.b32.xlu0 %v418, 8
        %v432 = vpop.permute.xlu0 %431
        %vm435 = vcmask 1047616
        %436 = vst.msk [vmem:[#allocation3] sm:$0xff] %vm435, %v430
        %437 = vst.msk [vmem:[#allocation3 + $0x8] sm:$0xff] %vm419, %v430
        %vm438 = vcmask 1041472
        %439 = vst.msk [vmem:[#allocation3 + $0x10] sm:$0x3] %vm438, %v432
        %440 = vst.msk [vmem:[#allocation3 + $0x18] sm:$0x3] %vm421, %v432
        %v441 = vld [vmem:[%s3] sm:$0xff]
        %v442 = vld [vmem:[%s3 + $0x8] sm:$0x1]
        %v443 = vld [vmem:[#allocation3] sm:$0xff]
        %v444 = vld [vmem:[#allocation3 + $0x8] sm:$0xff]
        %v445 = vlaneseq
        %v446 = vshrl.u32 %v445, 7
        %v447 = vsub.s32 0, %v446
        %v448 = vrot.slane %v441, %v447
        %v449 = vmul.f32 %v443, %v448
        %v450 = vadd.f32 %v449, 0.0
        %v451 = vlaneseq
        %v452 = vshrl.u32 %v451, 7
        %v453 = vsub.s32 1, %v452
        %v454 = vrot.slane %v441, %v453
        %456 = vrot.lane.b32.xlu0 %v454, 8
        %v457 = vpop.permute.xlu0 %456
        %v459 = vmul.f32 %v443, %v457
        %v460 = vmul.f32 %v444, %v457
        %463 = vrot.lane.b32.xlu0 %v459, 120
        %v464 = vpop.permute.xlu0 %463
        %465 = vrot.lane.b32.xlu0 %v460, 120
        %v466 = vpop.permute.xlu0 %465
        %vm467 = vcmask 982016
        %v468 = vsel %vm467, %v464, %v466
        %v470 = vadd.f32 %v450, %v468
        %v471 = vlaneseq
        %v472 = vshrl.u32 %v471, 7
        %v473 = vsub.s32 2, %v472
        %v474 = vrot.slane %v441, %v473
        %476 = vrot.lane.b32.xlu0 %v474, 16
        %v477 = vpop.permute.xlu0 %476
        %v479 = vmul.f32 %v443, %v477
        %v480 = vmul.f32 %v444, %v477
        %483 = vrot.lane.b32.xlu0 %v479, 112
        %v484 = vpop.permute.xlu0 %483
        %485 = vrot.lane.b32.xlu0 %v480, 112
        %v486 = vpop.permute.xlu0 %485
        %vm487 = vcmask 916480
        %v488 = vsel %vm487, %v484, %v486
        %v490 = vadd.f32 %v470, %v488
        %v491 = vld [vmem:[#allocation3] sm:$0xfe]
        %v492 = vld [vmem:[#allocation3 + $0x8] sm:$0xfe]
        %v493 = vld [vmem:[#allocation3 + $0x10] sm:$0x1]
        %v494 = vld [vmem:[#allocation3 + $0x18] sm:$0x1]
        %v495 = vlaneseq
        %v496 = vshrl.u32 %v495, 7
        %v497 = vsub.s32 3, %v496
        %v498 = vrot.slane %v441, %v497
        %v499 = vmul.f32 %v491, %v498
        %v500 = vmul.f32 %v493, %v498
        %vm503 = vcmask 1046528
        %v504 = vrot.slane %v499, 1
        %v505 = vrot.slane %v500, 1
        %v506 = vsel %vm503, %v504, %v505
        %v508 = vadd.f32 %v490, %v506
        %v509 = vlaneseq
        %v510 = vshrl.u32 %v509, 7
        %v511 = vsub.s32 4, %v510
        %v512 = vrot.slane %v441, %v511
        %514 = vrot.lane.b32.xlu0 %v512, 8
        %v515 = vpop.permute.xlu0 %514
        %v517 = vmul.f32 %v491, %v515
        %v518 = vmul.f32 %v492, %v515
        %v519 = vmul.f32 %v493, %v515
        %v520 = vmul.f32 %v494, %v515
        %v525 = vrot.slane %v517, 1
        %v526 = vrot.slane %v519, 1
        %v527 = vsel %vm503, %v525, %v526
        %v528 = vrot.slane %v518, 1
        %v529 = vrot.slane %v520, 1
        %v530 = vsel %vm503, %v528, %v529
        %531 = vrot.lane.b32.xlu0 %v527, 120
        %v532 = vpop.permute.xlu0 %531
        %533 = vrot.lane.b32.xlu0 %v530, 120
        %v534 = vpop.permute.xlu0 %533
        %v535 = vsel %vm467, %v532, %v534
        %v537 = vadd.f32 %v508, %v535
        %v538 = vlaneseq
        %v539 = vshrl.u32 %v538, 7
        %v540 = vsub.s32 5, %v539
        %v541 = vrot.slane %v441, %v540
        %543 = vrot.lane.b32.xlu0 %v541, 16
        %v544 = vpop.permute.xlu0 %543
        %v546 = vmul.f32 %v491, %v544
        %v547 = vmul.f32 %v492, %v544
        %v548 = vmul.f32 %v493, %v544
        %v549 = vmul.f32 %v494, %v544
        %v554 = vrot.slane %v546, 1
        %v555 = vrot.slane %v548, 1
        %v556 = vsel %vm503, %v554, %v555
        %v557 = vrot.slane %v547, 1
        %v558 = vrot.slane %v549, 1
        %v559 = vsel %vm503, %v557, %v558
        %560 = vrot.lane.b32.xlu0 %v556, 112
        %v561 = vpop.permute.xlu0 %560
        %562 = vrot.lane.b32.xlu0 %v559, 112
        %v563 = vpop.permute.xlu0 %562
        %v564 = vsel %vm487, %v561, %v563
        %v566 = vadd.f32 %v537, %v564
        %v567 = vld [vmem:[#allocation3] sm:$0xfc]
        %v568 = vld [vmem:[#allocation3 + $0x8] sm:$0xfc]
        %v569 = vld [vmem:[#allocation3 + $0x10] sm:$0x3]
        %v570 = vld [vmem:[#allocation3 + $0x18] sm:$0x3]
        %v571 = vlaneseq
        %v572 = vshrl.u32 %v571, 7
        %v573 = vsub.s32 6, %v572
        %v574 = vrot.slane %v441, %v573
        %v575 = vmul.f32 %v567, %v574
        %v576 = vmul.f32 %v569, %v574
        %vm579 = vcmask 1045504
        %v580 = vrot.slane %v575, 2
        %v581 = vrot.slane %v576, 2
        %v582 = vsel %vm579, %v580, %v581
        %v584 = vadd.f32 %v566, %v582
        %v585 = vlaneseq
        %v586 = vshrl.u32 %v585, 7
        %v587 = vsub.s32 7, %v586
        %v588 = vrot.slane %v441, %v587
        %590 = vrot.lane.b32.xlu0 %v588, 8
        %v591 = vpop.permute.xlu0 %590
        %v593 = vmul.f32 %v567, %v591
        %v594 = vmul.f32 %v568, %v591
        %v595 = vmul.f32 %v569, %v591
        %v596 = vmul.f32 %v570, %v591
        %v601 = vrot.slane %v593, 2
        %v602 = vrot.slane %v595, 2
        %v603 = vsel %vm579, %v601, %v602
        %v604 = vrot.slane %v594, 2
        %v605 = vrot.slane %v596, 2
        %v606 = vsel %vm579, %v604, %v605
        %607 = vrot.lane.b32.xlu0 %v603, 120
        %v608 = vpop.permute.xlu0 %607
        %609 = vrot.lane.b32.xlu0 %v606, 120
        %v610 = vpop.permute.xlu0 %609
        %v611 = vsel %vm467, %v608, %v610
        %v613 = vadd.f32 %v584, %v611
        %v614 = vlaneseq
        %v615 = vshrl.u32 %v614, 7
        %v616 = vsub.s32 0, %v615
        %v617 = vrot.slane %v442, %v616
        %619 = vrot.lane.b32.xlu0 %v617, 16
        %v620 = vpop.permute.xlu0 %619
        %v622 = vmul.f32 %v567, %v620
        %v623 = vmul.f32 %v568, %v620
        %v624 = vmul.f32 %v569, %v620
        %v625 = vmul.f32 %v570, %v620
        %v630 = vrot.slane %v622, 2
        %v631 = vrot.slane %v624, 2
        %v632 = vsel %vm579, %v630, %v631
        %v633 = vrot.slane %v623, 2
        %v634 = vrot.slane %v625, 2
        %v635 = vsel %vm579, %v633, %v634
        %636 = vrot.lane.b32.xlu0 %v632, 112
        %v637 = vpop.permute.xlu0 %636
        %638 = vrot.lane.b32.xlu0 %v635, 112
        %v639 = vpop.permute.xlu0 %638
        %v640 = vsel %vm487, %v637, %v639
        %v642 = vadd.f32 %v613, %v640
        %v643 = vld [vmem:[%s4] sm:$0x1]
        %v645 = vlaneseq
        %v646 = vshrl.u32 %v645, 7
        %v647 = vsub.s32 0, %v646
        %v648 = vrot.slane %v643, %v647
        %v650 = vadd.f32 %v642, %v648
        %v651 = vmax.f32 %v650, 0.0
        %v652 = vld [vmem:[%s5] sm:$0xff]
        %v653 = vld [vmem:[%s5 + $0x8] sm:$0xff]
        %v654 = vld [vmem:[%s5 + $0x10] sm:$0xff]
        %v655 = vld [vmem:[%s5 + $0x18] sm:$0xff]
        %v656 = vld [vmem:[%s5 + $0x20] sm:$0xff]
        %v657 = vld [vmem:[%s5 + $0x28] sm:$0xff]
        %v658 = vld [vmem:[%s5 + $0x30] sm:$0xff]
        %v659 = vld [vmem:[%s5 + $0x38] sm:$0xff]
        %v660 = vld [vmem:[%s5 + $0x40] sm:$0xff]
        %v661 = vld [vmem:[%s5 + $0x48] sm:$0xff]
        %v662 = vld [vmem:[%s5 + $0x50] sm:$0xff]
        %v663 = vld [vmem:[%s5 + $0x58] sm:$0xff]
        %v664 = vld [vmem:[%s5 + $0x60] sm:$0xff]
        %v665 = vld [vmem:[%s5 + $0x68] sm:$0xff]
        %v666 = vld [vmem:[%s5 + $0x70] sm:$0xff]
        %v667 = vld [vmem:[%s5 + $0x78] sm:$0xff]
        %v668 = vld [vmem:[%s6] sm:$0x1]
        %v670 = vlaneseq
        %v671 = vshrl.u32 %v670, 7
        %v672 = vsub.s32 0, %v671
        %v673 = vrot.slane %v668, %v672
        %675 = vmatprep.subr.mxu0 0.0
        %676 = vmatpush1.msra.mxu0 %v652
        %677 = vmatprep.subr.mxu0 0.0
        %678 = vmatpush1.msra.mxu0 %v653
        %679 = vmatprep.subr.mxu0 0.0
        %680 = vmatpush1.msra.mxu0 %v654
        %681 = vmatprep.subr.mxu0 0.0
        %682 = vmatpush1.msra.mxu0 %v655
        %683 = vmatprep.subr.mxu0 0.0
        %684 = vmatpush1.msra.mxu0 %v656
        %685 = vmatprep.subr.mxu0 0.0
        %686 = vmatpush1.msra.mxu0 %v657
        %687 = vmatprep.subr.mxu0 0.0
        %688 = vmatpush1.msra.mxu0 %v658
        %689 = vmatprep.subr.mxu0 0.0
        %690 = vmatpush1.msra.mxu0 %v659
        %691 = vmatprep.subr.mxu0 0.0
        %692 = vmatpush1.msra.mxu0 %v660
        %693 = vmatprep.subr.mxu0 0.0
        %694 = vmatpush1.msra.mxu0 %v661
        %695 = vmatprep.subr.mxu0 0.0
        %696 = vmatpush1.msra.mxu0 %v662
        %697 = vmatprep.subr.mxu0 0.0
        %698 = vmatpush1.msra.mxu0 %v663
        %699 = vmatprep.subr.mxu0 0.0
        %700 = vmatpush1.msra.mxu0 %v664
        %701 = vmatprep.subr.mxu0 0.0
        %702 = vmatpush1.msra.mxu0 %v665
        %703 = vmatprep.subr.mxu0 0.0
        %704 = vmatpush1.msra.mxu0 %v666
        %705 = vmatprep.subr.mxu0 0.0
        %706 = vmatpush1.msra.mxu0 %v667
        %707 = vmatprep.subr.mxu0 0.0
        %708 = vmatpush1.msra.mxu0 0.0
        %709 = vmatprep.subr.mxu0 0.0
        %710 = vmatpush1.msra.mxu0 0.0
        %711 = vmatprep.subr.mxu0 0.0
        %712 = vmatpush1.msra.mxu0 0.0
        %713 = vmatprep.subr.mxu0 0.0
        %714 = vmatpush1.msra.mxu0 0.0
        %715 = vmatprep.subr.mxu0 0.0
        %716 = vmatpush1.msra.mxu0 0.0
        %717 = vmatprep.subr.mxu0 0.0
        %718 = vmatpush1.msra.mxu0 0.0
        %719 = vmatprep.subr.mxu0 0.0
        %720 = vmatpush1.msra.mxu0 0.0
        %721 = vmatprep.subr.mxu0 0.0
        %722 = vmatpush1.msra.mxu0 0.0
        %723 = vmatprep.subr.mxu0 0.0
        %724 = vmatpush1.msra.mxu0 0.0
        %725 = vmatprep.subr.mxu0 0.0
        %726 = vmatpush1.msra.mxu0 0.0
        %727 = vmatprep.subr.mxu0 0.0
        %728 = vmatpush1.msra.mxu0 0.0
        %729 = vmatprep.subr.mxu0 0.0
        %730 = vmatpush1.msra.mxu0 0.0
        %731 = vmatprep.subr.mxu0 0.0
        %732 = vmatpush1.msra.mxu0 0.0
        %733 = vmatprep.subr.mxu0 0.0
        %734 = vmatpush1.msra.mxu0 0.0
        %735 = vmatprep.subr.mxu0 0.0
        %736 = vmatpush1.msra.mxu0 0.0
        %737 = vmatprep.subr.mxu0 0.0
        %738 = vmatpush1.msra.mxu0 0.0
        %739 = vmatprep.mubr.f32.mxu0 0.0
        %740 = vmatmul.mubr.f32.gmra.mrb[0].mxu0 %v651
        %v741 = vpop.f32.mrb[0].mxu0
        %v742 = vadd.f32 %v673, %v741
        %v743 = vpop.f32.mrb[0].mxu0
        %744 = vdwg.mxu0
        %s745 = scalar_lea.vmem %s290, %s299
        %v746 = vld [vmem:[%s745] sm:$0xff]
        %v747 = vadd.f32 %v742, %v746
        %748 = vst.msk [vmem:[%s285] sm:$0xff] %vm296, %v747
        %s749 = sand.u32 %s195, 1
        %s750 = scalar_lea.sflag [#allocation5], %s749
        %s751 = sand.u32 %s195, 1
        %s752 = smul.addr %s751, 8
        %s753 = scalar_lea.vmem [#allocation4], %s752
        // Predicated region
        $region49: #{tpu_custom_call.1} parent=47 // pred_check
          %p754 = pneg %p205
        $region50: #{tpu_custom_call.1} parent=47 // pred_check_branch
          %756 = sbr.rel (%p754) target = $region52
        $region51: #{tpu_custom_call.1} parent=47 // pred_region
          %s758 = ssub.s32 128, 128
          %759 = vsyncadd %s750, %s758
          %s760 = smul.addr %s25, 2
          %s761 = sadd.s32 %s26, %s760
          %s762 = smul.addr %s761, 128
          %s763 = scalar_lea.hbm %s7, %s762
          %s765 = sshll.u32 %s753, 4
          %s766 = int_to_ptr.vmem [resolvable:$true] %s765
          %768 = dma.vmem_to_hbm [thread:$0]  %s766, 128, %s763, %s750
        $region52: #{tpu_custom_call.1} parent=47 // pred_fallthru
          _
      $region48: #{tpu_custom_call.1} parent=5 // pred_fallthru
        _
      %p769 = scmp.le.s32.totalorder 2, %s16
      // Predicated region
      $region53: #{tpu_custom_call.1} parent=5 // pred_check
        %p770 = pneg %p769
      $region54: #{tpu_custom_call.1} parent=5 // pred_check_branch
        %772 = sbr.rel (%p770) target = $region56
      $region55: #{tpu_custom_call.1} parent=5 // pred_region
        %s773 = ssub.s32 %s16, 2
        // Predicated region
        $region57: #{tpu_custom_call.1} parent=55 // pred_check
          %p774 = pneg %p211
        $region58: #{tpu_custom_call.1} parent=55 // pred_check_branch
          %776 = sbr.rel (%p774) target = $region60
        $region59: #{tpu_custom_call.1} parent=55 // pred_region
          %s777 = sand.u32 %s196, 1
          %s778 = scalar_lea.sflag [#allocation5], %s777
          %s779 = sand.u32 %s196, 1
          %s780 = smul.addr %s779, 8
          %s781 = scalar_lea.vmem [#allocation4], %s780
          %782 = dma.done %s778, 128
        $region60: #{tpu_custom_call.1} parent=55 // pred_fallthru
          _
      $region56: #{tpu_custom_call.1} parent=5 // pred_fallthru
        _
    $region6: #{tpu_custom_call.1} parent=1 // loop_footer
      %s20 = sadd.s32 1, %s16
    $region7: #{tpu_custom_call.1} parent=1 // loop_footer_branch
      %15 = sbr.rel target = $region3
    $region8: #{tpu_custom_call.1} parent=1 // loop_exit
      _
    %783 = vsyncpa [#allocation5], 1
    %s784 = scalar_lea.sflag [#allocation5], 1
    %785 = vsyncpa %s784, 1

</llo_original>
